<compile_context>
chip_gen: v7x
topology: tpu7x:2x2x1
jax: 0.10.0
libtpu: 0.0.40
codegen_flags: <defaults>
</compile_context>

<pallas_src>
import functools
import math

import jax
import jax.numpy as jnp
from jax import lax
from jax.experimental import pallas as pl
from jax.experimental.pallas import tpu as pltpu


# ----------------------------------------------------------------------------
# Glue: patch extraction (PatchExtractor equivalent)
# ----------------------------------------------------------------------------
def patchify(imgs, patch_size):
    """(B, 3, H, W) -> (B, N, 3*p*p), non-overlapping p x p patches."""
    B, C, H, W = imgs.shape
    p = patch_size
    gh, gw = H // p, W // p
    x = imgs.reshape(B, C, gh, p, gw, p)
    x = jnp.transpose(x, (0, 2, 4, 1, 3, 5))  # (B, gh, gw, C, p, p)
    return x.reshape(B, gh * gw, C * p * p)


# ----------------------------------------------------------------------------
# Pallas kernel: patch embedding (linear projection + (bias + pos) in one add)
# Flattened to a single (B*N, Pd) block: B*N = 128 rows = one full MXU tile.
# ----------------------------------------------------------------------------
def _embed_kernel(patches_ref, w_ref, posb_ref, out_ref):
    x = patches_ref[...].astype(jnp.bfloat16)                    # (B*N, Pd)
    y = jnp.dot(x, w_ref[...], preferred_element_type=jnp.float32)
    out_ref[...] = (y + posb_ref[...]).astype(out_ref.dtype)     # (B*N, D)


def patch_embed(patches, w, posb):
    B, N, Pd = patches.shape
    D = w.shape[1]
    flat = patches.reshape(B * N, Pd)
    posb_tiled = jnp.tile(posb, (B, 1))                          # (B*N, D)
    out = pl.pallas_call(
        _embed_kernel,
        out_shape=jax.ShapeDtypeStruct((B * N, D), jnp.float32),
        grid=(1,),
        in_specs=[
            pl.BlockSpec((B * N, Pd), lambda i: (0, 0)),
            pl.BlockSpec((Pd, D), lambda i: (0, 0)),
            pl.BlockSpec((B * N, D), lambda i: (0, 0)),
        ],
        out_specs=pl.BlockSpec((B * N, D), lambda i: (0, 0)),
    )(flat, w, posb_tiled)
    return out.reshape(B, N, D)


# ----------------------------------------------------------------------------
# Glue: random masking
# TODO(synk): rand / argsort / gather have no clean Pallas primitive; kept in JAX.
# ----------------------------------------------------------------------------
def random_masking(x, mask_ratio, key):
    B, N, D = x.shape
    len_keep = int(N * (1 - mask_ratio))
    noise = jax.random.uniform(key, (B, N), dtype=jnp.float32)
    ids_shuffle = jnp.argsort(noise, axis=1)
    ids_restore = jnp.argsort(ids_shuffle, axis=1)
    ids_keep = ids_shuffle[:, :len_keep]
    x_masked = jnp.take_along_axis(x, ids_keep[:, :, None], axis=1)
    mask = jnp.ones((B, N), dtype=x.dtype)
    mask = mask.at[:, :len_keep].set(0.0)
    mask = jnp.take_along_axis(mask, ids_restore, axis=1)
    return x_masked, mask, ids_restore


# ----------------------------------------------------------------------------
# Pallas kernel: one post-norm TransformerEncoderLayer per grid step.
# grid = (B, L): B parallel (megacore on v7x), L arbitrary (activation carry).
# PyTorch defaults: norm_first=False, activation=relu, eval -> dropout=identity.
# ----------------------------------------------------------------------------
def _layer_norm(x, g, b, eps=1e-5):
    mu = jnp.mean(x, axis=-1, keepdims=True)
    var = jnp.mean(jnp.square(x - mu), axis=-1, keepdims=True)
    return (x - mu) * lax.rsqrt(var + eps) * g + b


def _encoder_layer_kernel(x_ref,
                          wqkv_ref, bqkv_ref, wo_ref, bo_ref,
                          ln1g_ref, ln1b_ref,
                          w1_ref, b1_ref, w2t_ref, b2_ref,
                          ln2g_ref, ln2b_ref,
                          out_ref, x_sc, *, num_heads, f_chunk):
    f32, bf16 = jnp.float32, jnp.bfloat16
    l = pl.program_id(1)

    # Load the (S, D) activations into the VMEM carry on the first layer.
    @pl.when(l == 0)
    def _():
        x_sc[...] = x_ref[0]

    x = x_sc[...]                                                 # (S, D) f32
    S, D = x.shape
    hd = D // num_heads
    scale = 1.0 / math.sqrt(hd)

    # ---- Self-attention --------------------------------------------------
    xb = x.astype(bf16)
    # Fused QKV projection: one lane-dense (S, D) @ (D, 3D) matmul + one bias.
    qkv = jnp.dot(xb, wqkv_ref[0], preferred_element_type=f32) + bqkv_ref[0]

    heads = []
    for h in range(num_heads):                                    # static unroll
        q = qkv[:, h * hd:(h + 1) * hd]                           # (S, hd)
        k = qkv[:, D + h * hd:D + (h + 1) * hd]
        v = qkv[:, 2 * D + h * hd:2 * D + (h + 1) * hd]
        # Contract hd directly (no explicit k.T transpose).
        s = lax.dot_general(q.astype(bf16), k.astype(bf16),
                            dimension_numbers=(((1,), (1,)), ((), ())),
                            preferred_element_type=f32) * scale   # (S, S)
        s = s - jnp.max(s, axis=-1, keepdims=True)
        p = jnp.exp(s)
        p = p * pl.reciprocal(jnp.sum(p, axis=-1, keepdims=True), approx=True)
        heads.append(jnp.dot(p.astype(bf16), v.astype(bf16),
                             preferred_element_type=f32))         # (S, hd)
    attn = jnp.concatenate(heads, axis=-1)                        # (S, D) lane concat
    attn = jnp.dot(attn.astype(bf16), wo_ref[0],
                   preferred_element_type=f32) + bo_ref[0]        # single out-proj

    y = _layer_norm(x + attn, ln1g_ref[0], ln1b_ref[0])           # post-norm 1

    # ---- FFN, tiled over F to cap live vregs ------------------------------
    yb = y.astype(bf16)
    F = w1_ref.shape[2]
    ffn = jnp.zeros((S, D), f32)
    for c in range(0, F, f_chunk):                                # static unroll
        h1 = jnp.dot(yb, w1_ref[0, :, c:c + f_chunk],
                     preferred_element_type=f32) + b1_ref[0, :, c:c + f_chunk]
        h1 = jnp.maximum(h1, 0.0)                                 # relu
        # w2 stored transposed (D, F): contract the F axis -> lane-dense weight.
        ffn = ffn + lax.dot_general(h1.astype(bf16), w2t_ref[0, :, c:c + f_chunk],
                                    dimension_numbers=(((1,), (1,)), ((), ())),
                                    preferred_element_type=f32)
    ffn = ffn + b2_ref[0]

    x_new = _layer_norm(y + ffn, ln2g_ref[0], ln2b_ref[0])        # post-norm 2
    x_sc[...] = x_new

    @pl.when(l == pl.num_programs(1) - 1)
    def _():
        out_ref[0] = x_new.astype(out_ref.dtype)


def mae_transformer(x, p, *, num_layers, num_heads, f_chunk=512):
    # Attention is over the token axis of (B, S, D) per sample (MAE semantics).
    B, S, D = x.shape
    L = num_layers
    F = p["w1"].shape[2]
    f_chunk = min(f_chunk, F)
    assert F % f_chunk == 0
    kernel = functools.partial(_encoder_layer_kernel,
                               num_heads=num_heads, f_chunk=f_chunk)

    def wspec(shape):
        # Per-layer weight block, indexed by the layer grid axis so Pallas can
        # double-buffer layer l+1 weight DMA behind layer l compute.
        return pl.BlockSpec((1,) + shape[1:], lambda b, l: (l, 0, 0))

    return pl.pallas_call(
        kernel,
        out_shape=jax.ShapeDtypeStruct((B, S, D), jnp.float32),
        grid=(B, L),
        in_specs=[
            pl.BlockSpec((1, S, D), lambda b, l: (b, 0, 0)),      # DMA'd once per b
            wspec((L, D, 3 * D)),                                 # wqkv
            wspec((L, 1, 3 * D)),                                 # bqkv (fused bias)
            wspec((L, D, D)),                                     # wo
            wspec((L, 1, D)),                                     # bo
            wspec((L, 1, D)), wspec((L, 1, D)),                   # ln1 g/b
            wspec((L, D, F)), wspec((L, 1, F)),                   # w1, b1
            wspec((L, D, F)), wspec((L, 1, D)),                   # w2t, b2
            wspec((L, 1, D)), wspec((L, 1, D)),                   # ln2 g/b
        ],
        out_specs=pl.BlockSpec((1, S, D), lambda b, l: (b, 0, 0)),
        scratch_shapes=[pltpu.VMEM((S, D), jnp.float32)],         # activation carry
        compiler_params=pltpu.CompilerParams(
            dimension_semantics=("parallel", "arbitrary")),
    )(x, p["wqkv"], p["bqkv"], p["wo"], p["bo"], p["ln1g"], p["ln1b"],
      p["w1"], p["b1"], p["w2t"], p["b2"], p["ln2g"], p["ln2b"])


# ----------------------------------------------------------------------------
# Parameter init (deterministic, synthetic), fused / lane-dense layouts
# ----------------------------------------------------------------------------
def init_params(key, patch_size, img_size, latent_dim, num_heads,
                num_layers=4, dim_feedforward=2048):
    D, L, F = latent_dim, num_layers, dim_feedforward
    Pd = 3 * patch_size * patch_size
    N = (img_size[0] // patch_size) * (img_size[1] // patch_size)
    ks = jax.random.split(key, 8)

    def w_init(k, shape, fan_in):
        return jax.random.normal(k, shape, jnp.float32) / math.sqrt(fan_in)

    embed_w = w_init(ks[0], (Pd, D), Pd)
    pos = 0.02 * jax.random.normal(ks[1], (N, D), jnp.float32)
    embed_b = jnp.zeros((D,), jnp.float32)

    wq = w_init(ks[2], (L, D, D), D)
    wk = w_init(ks[3], (L, D, D), D)
    wv = w_init(ks[4], (L, D, D), D)
    wo = w_init(ks[5], (L, D, D), D)
    w1 = w_init(ks[6], (L, D, F), D)
    w2 = w_init(ks[7], (L, F, D), F)

    return {
        "embed_w": embed_w.astype(jnp.bfloat16),
        "posb": pos + embed_b[None, :],                               # bias folded in
        "wqkv": jnp.concatenate([wq, wk, wv], axis=-1).astype(jnp.bfloat16),  # (L,D,3D)
        "bqkv": jnp.zeros((L, 1, 3 * D), jnp.float32),
        "wo": wo.astype(jnp.bfloat16),                                # (L, D, D)
        "bo": jnp.zeros((L, 1, D), jnp.float32),
        "ln1g": jnp.ones((L, 1, D), jnp.float32),
        "ln1b": jnp.zeros((L, 1, D), jnp.float32),
        "w1": w1.astype(jnp.bfloat16),                                # (L, D, F)
        "b1": jnp.zeros((L, 1, F), jnp.float32),
        "w2t": jnp.transpose(w2, (0, 2, 1)).astype(jnp.bfloat16),     # (L, D, F)
        "b2": jnp.zeros((L, 1, D), jnp.float32),
        "ln2g": jnp.ones((L, 1, D), jnp.float32),
        "ln2b": jnp.zeros((L, 1, D), jnp.float32),
    }


# ----------------------------------------------------------------------------
# Full forward
# ----------------------------------------------------------------------------
def mae_encoder_forward(params, imgs, mask_key, *, patch_size, num_heads,
                        num_layers=4, mask_ratio=0.75):
    patches = patchify(imgs, patch_size)                              # (B, N, 3*p*p)
    tokens = patch_embed(patches, params["embed_w"], params["posb"])  # (B, N, D)
    x_masked, mask, ids_restore = random_masking(tokens, mask_ratio, mask_key)
    x_encoded = mae_transformer(x_masked, params,
                                num_layers=num_layers, num_heads=num_heads)
    return x_encoded, mask, ids_restore


# ----------------------------------------------------------------------------
if __name__ == "__main__":
    patch_size = 4
    img_size = (32, 32)       # -> N = 64 patches, input_dim = 48
    latent_dim = 32
    num_heads = 4
    num_layers = 4
    B = 2

    key = jax.random.PRNGKey(0)
    k_img, k_mask, k_param = jax.random.split(key, 3)

    imgs = jax.random.normal(k_img, (B, 3, img_size[0], img_size[1]), jnp.float32)
    params = init_params(k_param, patch_size, img_size, latent_dim, num_heads,
                         num_layers=num_layers)

    x_encoded, mask, ids_restore = mae_encoder_forward(
        params, imgs, k_mask, patch_size=patch_size, num_heads=num_heads,
        num_layers=num_layers, mask_ratio=0.75)

    jax.block_until_ready((x_encoded, mask, ids_restore))

    N = (img_size[0] // patch_size) * (img_size[1] // patch_size)
    len_keep = int(N * 0.25)
    assert x_encoded.shape == (B, len_keep, latent_dim)
    assert mask.shape == (B, N)
    assert ids_restore.shape == (B, N)
    assert bool(jnp.all(jnp.isfinite(x_encoded)))

    print("KERNEL_OK")
</pallas_src>

<mosaic_0001>
module attributes {stable_mosaic.version = 11 : i64} {
  func.func @_embed_kernel(%arg0: i32, %arg1: memref<128x48xf32, #tpu.memory_space<vmem>>, %arg2: memref<48x32xbf16, #tpu.memory_space<vmem>>, %arg3: memref<128x32xf32, #tpu.memory_space<vmem>>, %arg4: memref<128x32xf32, #tpu.memory_space<vmem>>) attributes {dimension_semantics = [#tpu.dimension_semantics<arbitrary>], iteration_bounds = array<i64: 1>, scalar_prefetch = 0 : i64, scratch_operands = 0 : i64, tpu.core_type = #tpu.core_type<tc>, window_params = [{pipeline_mode = #tpu.pipeline_mode<synchronous>, transform_indices = @transform_0, window_bounds = array<i64: 128, 48>}, {pipeline_mode = #tpu.pipeline_mode<synchronous>, transform_indices = @transform_1, window_bounds = array<i64: 48, 32>}, {pipeline_mode = #tpu.pipeline_mode<synchronous>, transform_indices = @transform_2, window_bounds = array<i64: 128, 32>}, {pipeline_mode = #tpu.pipeline_mode<synchronous>, transform_indices = @transform_3, window_bounds = array<i64: 128, 32>}]} {
    %c0 = arith.constant 0 : index
    %c0_0 = arith.constant 0 : index
    %0 = vector.load %arg1[%c0, %c0_0] : memref<128x48xf32, #tpu.memory_space<vmem>>, vector<128x48xf32>
    %1 = arith.truncf %0 : vector<128x48xf32> to vector<128x48xbf16>
    %c0_1 = arith.constant 0 : index
    %c0_2 = arith.constant 0 : index
    %2 = vector.load %arg2[%c0_1, %c0_2] : memref<48x32xbf16, #tpu.memory_space<vmem>>, vector<48x32xbf16>
    %cst = arith.constant dense<0.000000e+00> : vector<128x32xf32>
    %3 = tpu.matmul %1, %2, %cst {dimension_numbers = #tpu.dot_dimension_numbers<[1], [0], [0], [1], [0, 0, 1, 1], [], []>} : vector<128x48xbf16>, vector<48x32xbf16>, vector<128x32xf32> -> vector<128x32xf32>
    %c0_3 = arith.constant 0 : index
    %c0_4 = arith.constant 0 : index
    %4 = vector.load %arg3[%c0_3, %c0_4] : memref<128x32xf32, #tpu.memory_space<vmem>>, vector<128x32xf32>
    %5 = arith.addf %3, %4 : vector<128x32xf32>
    %c0_5 = arith.constant 0 : index
    %c0_6 = arith.constant 0 : index
    %6 = vector.load %arg4[%c0_5, %c0_6] : memref<128x32xf32, #tpu.memory_space<vmem>>, vector<128x32xf32>
    tpu.vector_store %arg4[%c0_5, %c0_6], %5 {strides = array<i32>} : memref<128x32xf32, #tpu.memory_space<vmem>>, vector<128x32xf32>,
    return
  }
  func.func @transform_0(%arg0: i32) -> (i32, i32) {
    %c0_i32 = arith.constant 0 : i32
    %c0_i32_0 = arith.constant 0 : i32
    %c0_i32_1 = arith.constant 0 : i32
    return %c0_i32, %c0_i32_0 : i32, i32
  }
  func.func @transform_1(%arg0: i32) -> (i32, i32) {
    %c0_i32 = arith.constant 0 : i32
    %c0_i32_0 = arith.constant 0 : i32
    %c0_i32_1 = arith.constant 0 : i32
    return %c0_i32, %c0_i32_0 : i32, i32
  }
  func.func @transform_2(%arg0: i32) -> (i32, i32) {
    %c0_i32 = arith.constant 0 : i32
    %c0_i32_0 = arith.constant 0 : i32
    %c0_i32_1 = arith.constant 0 : i32
    return %c0_i32, %c0_i32_0 : i32, i32
  }
  func.func @transform_3(%arg0: i32) -> (i32, i32) {
    %c0_i32 = arith.constant 0 : i32
    %c0_i32_0 = arith.constant 0 : i32
    %c0_i32_1 = arith.constant 0 : i32
    return %c0_i32, %c0_i32_0 : i32, i32
  }
}

</mosaic_0001>

<llo_original>
// kernel: tpu_custom_call.1
$region0: #{tpu_custom_call.1}
  #allocation0 [shape = 'u32[]', space=smem, size = 0x4, offset = 0x4, fixed_abs, tag = 'smem constant byte address 0x4 - core index']
  #allocation1 [shape = 'u32[144,128]{1,0:T(1,128)}', space=vmem, size = 0x12000, scoped, tag = 'internal scratch']
  %s0 = inlined_call_operand.vmem [shape: f32[128,48], index: 0, kind: input, shape index: {}]
  %s1 = inlined_call_operand.vmem [shape: bf16[48,32], index: 1, kind: input, shape index: {}]
  %s2 = inlined_call_operand.vmem [shape: f32[128,32], index: 2, kind: input, shape index: {}]
  %s3 = inlined_call_operand.vmem [shape: f32[128,32], index: 3, kind: output, shape index: {}]
  %s4 = sld [smem:[#allocation0]]
  $region22: #{tpu_custom_call.1} parent=0
    _
  %s6 = ssub.s32 1, %s4
  %s7 = scalar_select 0, %s6, %s4
  // Predicated region
  $region2: #{tpu_custom_call.1} parent=0 // pred_check
    _
  $region3: #{tpu_custom_call.1} parent=0 // pred_check_branch
    %9 = sbr.rel (0) target = $region5
  $region4: #{tpu_custom_call.1} parent=0 // pred_region
    _
  $region5: #{tpu_custom_call.1} parent=0 // pred_fallthru
    _
  // Predicated region
  $region6: #{tpu_custom_call.1} parent=0 // pred_check
    _
  $region7: #{tpu_custom_call.1} parent=0 // pred_check_branch
    %11 = sbr.rel (0) target = $region9
  $region8: #{tpu_custom_call.1} parent=0 // pred_region
    _
  $region9: #{tpu_custom_call.1} parent=0 // pred_fallthru
    _
  // Predicated region
  $region10: #{tpu_custom_call.1} parent=0 // pred_check
    _
  $region11: #{tpu_custom_call.1} parent=0 // pred_check_branch
    %13 = sbr.rel (0) target = $region13
  $region12: #{tpu_custom_call.1} parent=0 // pred_region
    _
  $region13: #{tpu_custom_call.1} parent=0 // pred_fallthru
    _
  %v15 = vld [vmem:[%s0] sm:$0xff]
  %v16 = vld [vmem:[%s0 + $0x8] sm:$0xff]
  %v17 = vld [vmem:[%s0 + $0x10] sm:$0xff]
  %v18 = vld [vmem:[%s0 + $0x18] sm:$0xff]
  %v19 = vld [vmem:[%s0 + $0x20] sm:$0xff]
  %v20 = vld [vmem:[%s0 + $0x28] sm:$0xff]
  %v21 = vld [vmem:[%s0 + $0x30] sm:$0xff]
  %v22 = vld [vmem:[%s0 + $0x38] sm:$0xff]
  %v23 = vld [vmem:[%s0 + $0x40] sm:$0xff]
  %v24 = vld [vmem:[%s0 + $0x48] sm:$0xff]
  %v25 = vld [vmem:[%s0 + $0x50] sm:$0xff]
  %v26 = vld [vmem:[%s0 + $0x58] sm:$0xff]
  %v27 = vld [vmem:[%s0 + $0x60] sm:$0xff]
  %v28 = vld [vmem:[%s0 + $0x68] sm:$0xff]
  %v29 = vld [vmem:[%s0 + $0x70] sm:$0xff]
  %v30 = vld [vmem:[%s0 + $0x78] sm:$0xff]
  %v31 = vpack.c.bf16 %v16, %v15
  %v32 = vpack.c.bf16 %v18, %v17
  %v33 = vpack.c.bf16 %v20, %v19
  %v34 = vpack.c.bf16 %v22, %v21
  %v35 = vpack.c.bf16 %v24, %v23
  %v36 = vpack.c.bf16 %v26, %v25
  %v37 = vpack.c.bf16 %v28, %v27
  %v38 = vpack.c.bf16 %v30, %v29
  %v39 = vld [vmem:[%s1] sm:$0xf]
  %v40 = vld [vmem:[%s1 + $0x4] sm:$0xf]
  %v41 = vld [vmem:[%s1 + $0x8] sm:$0xf]
  %v42 = vld [vmem:[%s1 + $0xc] sm:$0xf]
  %v43 = vld [vmem:[%s1 + $0x10] sm:$0xf]
  %v44 = vld [vmem:[%s1 + $0x14] sm:$0xf]
  %v45 = vld [vmem:[%s2] sm:$0xff]
  %v46 = vld [vmem:[%s2 + $0x8] sm:$0xff]
  %v47 = vld [vmem:[%s2 + $0x10] sm:$0xff]
  %v48 = vld [vmem:[%s2 + $0x18] sm:$0xff]
  %v49 = vld [vmem:[%s2 + $0x20] sm:$0xff]
  %v50 = vld [vmem:[%s2 + $0x28] sm:$0xff]
  %v51 = vld [vmem:[%s2 + $0x30] sm:$0xff]
  %v52 = vld [vmem:[%s2 + $0x38] sm:$0xff]
  %v53 = vld [vmem:[%s2 + $0x40] sm:$0xff]
  %v54 = vld [vmem:[%s2 + $0x48] sm:$0xff]
  %v55 = vld [vmem:[%s2 + $0x50] sm:$0xff]
  %v56 = vld [vmem:[%s2 + $0x58] sm:$0xff]
  %v57 = vld [vmem:[%s2 + $0x60] sm:$0xff]
  %v58 = vld [vmem:[%s2 + $0x68] sm:$0xff]
  %v59 = vld [vmem:[%s2 + $0x70] sm:$0xff]
  %v60 = vld [vmem:[%s2 + $0x78] sm:$0xff]
  %v67 = vunpack.c.l.b16 %v39
  %v68 = vunpack.c.l.b16 %v40
  %v69 = vunpack.c.l.b16 %v41
  %v70 = vunpack.c.l.b16 %v42
  %v71 = vunpack.c.l.b16 %v43
  %v72 = vunpack.c.l.b16 %v44
  %v73 = vpack.c.b16 %v68, %v67
  %v74 = vpack.c.b16 %v70, %v69
  %v75 = vpack.c.b16 %v72, %v71
  %vm79 = vcmask 392192
  %v81 = vsel %vm79, %v31, 0
  %v84 = vsel %vm79, %v32, 0
  %v87 = vsel %vm79, %v33, 0
  %v90 = vsel %vm79, %v34, 0
  %v93 = vsel %vm79, %v35, 0
  %v96 = vsel %vm79, %v36, 0
  %v99 = vsel %vm79, %v37, 0
  %v102 = vsel %vm79, %v38, 0
  %104 = vmatprep.subr.bf16.mxu0 0
  %105 = vmatpush1.bf16.msra.mxu0 %v73
  %106 = vmatprep.subr.bf16.mxu0 0
  %107 = vmatpush1.bf16.msra.mxu0 %v74
  %108 = vmatprep.subr.bf16.mxu0 0
  %109 = vmatpush1.bf16.msra.mxu0 %v75
  %110 = vmatprep.subr.bf16.mxu0 0
  %111 = vmatpush1.bf16.msra.mxu0 0
  %112 = vmatprep.subr.bf16.mxu0 0
  %113 = vmatpush1.bf16.msra.mxu0 0
  %114 = vmatprep.subr.bf16.mxu0 0
  %115 = vmatpush1.bf16.msra.mxu0 0
  %116 = vmatprep.subr.bf16.mxu0 0
  %117 = vmatpush1.bf16.msra.mxu0 0
  %118 = vmatprep.subr.bf16.mxu0 0
  %119 = vmatpush1.bf16.msra.mxu0 0
  %120 = vmatprep.subr.bf16.mxu0 0
  %121 = vmatpush1.bf16.msra.mxu0 0
  %122 = vmatprep.subr.bf16.mxu0 0
  %123 = vmatpush1.bf16.msra.mxu0 0
  %124 = vmatprep.subr.bf16.mxu0 0
  %125 = vmatpush1.bf16.msra.mxu0 0
  %126 = vmatprep.subr.bf16.mxu0 0
  %127 = vmatpush1.bf16.msra.mxu0 0
  %128 = vmatprep.subr.bf16.mxu0 0
  %129 = vmatpush1.bf16.msra.mxu0 0
  %130 = vmatprep.subr.bf16.mxu0 0
  %131 = vmatpush1.bf16.msra.mxu0 0
  %132 = vmatprep.subr.bf16.mxu0 0
  %133 = vmatpush1.bf16.msra.mxu0 0
  %134 = vmatprep.subr.bf16.mxu0 0
  %135 = vmatpush1.bf16.msra.mxu0 0
  %136 = vmatprep.mubr.bf16.mxu0 0
  %137 = vmatmul.mubr.bf16.gmra.mrb[0].mxu0 %v81
  %v138 = vpop.f32.mrb[0].mxu0
  %v139 = vadd.f32 %v45, %v138
  %v140 = vpop.f32.mrb[0].mxu0
  %v141 = vpop.f32.mrb[0].mxu0
  %v142 = vadd.f32 %v46, %v141
  %v143 = vpop.f32.mrb[0].mxu0
  %144 = vmatprep.mubr.bf16.mxu0 0
  %145 = vmatmul.mubr.bf16.gmra.mrb[0].mxu0 %v84
  %v146 = vpop.f32.mrb[0].mxu0
  %v147 = vadd.f32 %v47, %v146
  %v148 = vpop.f32.mrb[0].mxu0
  %v149 = vpop.f32.mrb[0].mxu0
  %v150 = vadd.f32 %v48, %v149
  %v151 = vpop.f32.mrb[0].mxu0
  %152 = vmatprep.mubr.bf16.mxu0 0
  %153 = vmatmul.mubr.bf16.gmra.mrb[0].mxu0 %v87
  %v154 = vpop.f32.mrb[0].mxu0
  %v155 = vadd.f32 %v49, %v154
  %v156 = vpop.f32.mrb[0].mxu0
  %v157 = vpop.f32.mrb[0].mxu0
  %v158 = vadd.f32 %v50, %v157
  %v159 = vpop.f32.mrb[0].mxu0
  %160 = vmatprep.mubr.bf16.mxu0 0
  %161 = vmatmul.mubr.bf16.gmra.mrb[0].mxu0 %v90
  %v162 = vpop.f32.mrb[0].mxu0
  %v163 = vadd.f32 %v51, %v162
  %v164 = vpop.f32.mrb[0].mxu0
  %v165 = vpop.f32.mrb[0].mxu0
  %v166 = vadd.f32 %v52, %v165
  %v167 = vpop.f32.mrb[0].mxu0
  %168 = vmatprep.mubr.bf16.mxu0 0
  %169 = vmatmul.mubr.bf16.gmra.mrb[0].mxu0 %v93
  %v170 = vpop.f32.mrb[0].mxu0
  %v171 = vadd.f32 %v53, %v170
  %v172 = vpop.f32.mrb[0].mxu0
  %v173 = vpop.f32.mrb[0].mxu0
  %v174 = vadd.f32 %v54, %v173
  %v175 = vpop.f32.mrb[0].mxu0
  %176 = vmatprep.mubr.bf16.mxu0 0
  %177 = vmatmul.mubr.bf16.gmra.mrb[0].mxu0 %v96
  %v178 = vpop.f32.mrb[0].mxu0
  %v179 = vadd.f32 %v55, %v178
  %v180 = vpop.f32.mrb[0].mxu0
  %v181 = vpop.f32.mrb[0].mxu0
  %v182 = vadd.f32 %v56, %v181
  %v183 = vpop.f32.mrb[0].mxu0
  %184 = vmatprep.mubr.bf16.mxu0 0
  %185 = vmatmul.mubr.bf16.gmra.mrb[0].mxu0 %v99
  %v186 = vpop.f32.mrb[0].mxu0
  %v187 = vadd.f32 %v57, %v186
  %v188 = vpop.f32.mrb[0].mxu0
  %v189 = vpop.f32.mrb[0].mxu0
  %v190 = vadd.f32 %v58, %v189
  %v191 = vpop.f32.mrb[0].mxu0
  %192 = vmatprep.mubr.bf16.mxu0 0
  %193 = vmatmul.mubr.bf16.gmra.mrb[0].mxu0 %v102
  %v194 = vpop.f32.mrb[0].mxu0
  %v195 = vadd.f32 %v59, %v194
  %v196 = vpop.f32.mrb[0].mxu0
  %v197 = vpop.f32.mrb[0].mxu0
  %v198 = vadd.f32 %v60, %v197
  %v199 = vpop.f32.mrb[0].mxu0
  %200 = vdwg.mxu0
  %vm201 = vcmask 261120
  %202 = vst.msk [vmem:[%s3] sm:$0xff] %vm201, %v139
  %203 = vst.msk [vmem:[%s3 + $0x8] sm:$0xff] %vm201, %v142
  %204 = vst.msk [vmem:[%s3 + $0x10] sm:$0xff] %vm201, %v147
  %205 = vst.msk [vmem:[%s3 + $0x18] sm:$0xff] %vm201, %v150
  %206 = vst.msk [vmem:[%s3 + $0x20] sm:$0xff] %vm201, %v155
  %207 = vst.msk [vmem:[%s3 + $0x28] sm:$0xff] %vm201, %v158
  %208 = vst.msk [vmem:[%s3 + $0x30] sm:$0xff] %vm201, %v163
  %209 = vst.msk [vmem:[%s3 + $0x38] sm:$0xff] %vm201, %v166
  %210 = vst.msk [vmem:[%s3 + $0x40] sm:$0xff] %vm201, %v171
  %211 = vst.msk [vmem:[%s3 + $0x48] sm:$0xff] %vm201, %v174
  %212 = vst.msk [vmem:[%s3 + $0x50] sm:$0xff] %vm201, %v179
  %213 = vst.msk [vmem:[%s3 + $0x58] sm:$0xff] %vm201, %v182
  %214 = vst.msk [vmem:[%s3 + $0x60] sm:$0xff] %vm201, %v187
  %215 = vst.msk [vmem:[%s3 + $0x68] sm:$0xff] %vm201, %v190
  %216 = vst.msk [vmem:[%s3 + $0x70] sm:$0xff] %vm201, %v195
  %217 = vst.msk [vmem:[%s3 + $0x78] sm:$0xff] %vm201, %v198
  // Predicated region
  $region14: #{tpu_custom_call.1} parent=0 // pred_check
    _
  $region15: #{tpu_custom_call.1} parent=0 // pred_check_branch
    %219 = sbr.rel (0) target = $region17
  $region16: #{tpu_custom_call.1} parent=0 // pred_region
    _
  $region17: #{tpu_custom_call.1} parent=0 // pred_fallthru
    _
  // Predicated region
  $region18: #{tpu_custom_call.1} parent=0 // pred_check
    _
  $region19: #{tpu_custom_call.1} parent=0 // pred_check_branch
    %221 = sbr.rel (0) target = $region21
  $region20: #{tpu_custom_call.1} parent=0 // pred_region
    _
  $region21: #{tpu_custom_call.1} parent=0 // pred_fallthru
    _

</llo_original>
